<compile_context>
chip_gen: v7x
topology: tpu7x:2x2x1
jax: 0.10.0
libtpu: 0.0.40
codegen_flags: <defaults>
</compile_context>

<pallas_src>
import functools
import math

import jax
import jax.numpy as jnp
from jax.experimental import pallas as pl
from jax.experimental.pallas import tpu as pltpu


def _activate(x):
    # tanh-approximate GELU (tanh lowers to the EUP; bf16-capable on v6e/v7x).
    return jax.nn.gelu(x, approximate=True)


def _round_up(x, m):
    return ((x + m - 1) // m) * m


def _default_act_dtype():
    """bf16 elementwise math only where the VPU/EUP supports it (v6e/v7x)."""
    try:
        kind = jax.devices()[0].device_kind.lower()
    except Exception:
        return jnp.float32
    if "v6" in kind or "v7" in kind or "7x" in kind:
        return jnp.bfloat16
    return jnp.float32


def time_encode_kernel(t_ref, freqs_ref, phase_ref, w1_ref, b1_ref,
                       w2_ref, b2_ref, o_ref, *, act_dtype):
    # Per grid step:
    #   t_ref:     [TB, 1]        f32 time steps (batch tile)
    #   freqs_ref: [1, dim]       f32, concat([f, f]) with f = exp(-i*log(theta)/(half-1))
    #   phase_ref: [1, dim]       f32, [0]*half + [pi/2]*half
    #   w1_ref:    [dim, hidden]  matmul dtype ([in, out] layout -> y = x @ W)
    #   b1_ref:    [1, hidden]    f32
    #   w2_ref:    [hidden, Npad] matmul dtype, zero-padded to lane-dense Npad
    #   b2_ref:    [1, Npad]      f32 (zero-padded)
    #   o_ref:     [TB, Npad]     out dtype (f32 or bf16)
    t = t_ref[...]                                           # [TB, 1]
    arg = t * freqs_ref[...] + phase_ref[...]                # [TB, dim], f32 always
    emb = jnp.sin(arg)                                       # sin & cos in one EUP pass

    h = jnp.dot(emb.astype(w1_ref.dtype), w1_ref[...],
                preferred_element_type=jnp.float32)          # f32 accumulation
    h = _activate((h + b1_ref[...]).astype(act_dtype))       # bf16 on v6e/v7x, f32 on v5e

    out = jnp.dot(h.astype(w2_ref.dtype), w2_ref[...],
                  preferred_element_type=jnp.float32) + b2_ref[...]
    o_ref[...] = out.astype(o_ref.dtype)


def prepare_params(params, channel_time, *, theta=10000.0,
                   matmul_dtype=jnp.bfloat16):
    """One-time constant prep: freqs/phase, bias reshape, lane padding, casts.

    matmul_dtype=bf16 is the production path on all generations (f32 operands
    cost 3-4x MXU time); f32 is kept only for numerics testing.
    """
    assert channel_time % 4 == 0 and channel_time >= 16, \
        "channel_time must be a multiple of 4 and >= 16 (half_dim >= 2)"
    dim = channel_time // 4
    half_dim = dim // 2
    hidden = channel_time // 2
    n_pad = _round_up(channel_time, 128)   # lane-dense output width

    emb_scale = math.log(theta) / (half_dim - 1)
    freqs = jnp.exp(jnp.arange(half_dim, dtype=jnp.float32) * -emb_scale)
    freqs2 = jnp.concatenate([freqs, freqs]).reshape(1, dim)
    phase = jnp.concatenate([jnp.zeros((half_dim,), jnp.float32),
                             jnp.full((half_dim,), math.pi / 2, jnp.float32)]
                            ).reshape(1, dim)

    w2p = jnp.zeros((hidden, n_pad), jnp.float32).at[:, :channel_time].set(
        params["w2"].astype(jnp.float32))
    b2p = jnp.zeros((1, n_pad), jnp.float32).at[:, :channel_time].set(
        params["b2"].astype(jnp.float32))

    return {
        "freqs2": freqs2,
        "phase": phase,
        "w1": params["w1"].astype(matmul_dtype),
        "b1": params["b1"].reshape(1, hidden).astype(jnp.float32),
        "w2": w2p.astype(matmul_dtype),
        "b2": b2p,
    }


def _choose_block_rows(bs_pad, n_pad, dim, hidden, w_bytes, out_bytes, max_rows):
    """Batch tile from a VMEM budget; aligned to 16 rows; >=2 grid steps when useful."""
    budget = 24 * 1024 * 1024                     # stays inside 32 MiB scoped VMEM
    # double-buffered weights / consts / biases (BlockSpec pipelining default)
    const_bytes = 2 * ((dim * hidden + hidden * n_pad) * w_bytes
                       + (2 * dim + hidden + n_pad) * 4)
    per_row = 2 * (n_pad * out_bytes + 4)         # double-buffered out tile + t tile
    avail = max(budget - const_bytes, 16 * per_row)
    tb = min(max_rows, avail // per_row, bs_pad)
    tb = max(16, (tb // 16) * 16)
    # Give the 'parallel' batch axis >= 2 steps (v7x megacore) for non-tiny batches.
    if bs_pad >= 64 and pl.cdiv(bs_pad, tb) < 2:
        tb = max(16, _round_up(pl.cdiv(bs_pad, 2), 16))
    return int(tb)


@functools.partial(jax.jit, static_argnames=("channel_time", "block_rows",
                                             "out_dtype", "act_dtype",
                                             "trim_output"))
def time_encode(t, prep, *, channel_time, block_rows=8192,
                out_dtype=jnp.bfloat16, act_dtype=jnp.float32,
                trim_output=True):
    """t: [bs] float time steps -> [bs, channel_time] embedding (out_dtype).

    With trim_output=False the lane-padded [bs_pad, n_pad] buffer is returned
    as-is (no extra XLA copy) for consumers that can take the padded layout.
    """
    dim = prep["freqs2"].shape[1]
    hidden = prep["w1"].shape[1]
    n_pad = prep["w2"].shape[1]

    bs = t.shape[0]
    bs_pad = _round_up(max(bs, 1), 16)            # pad only to the row-alignment, not a full tile
    t2d = jnp.zeros((bs_pad, 1), jnp.float32).at[:bs, 0].set(t.astype(jnp.float32))

    out_bytes = jnp.dtype(out_dtype).itemsize
    w_bytes = jnp.dtype(prep["w1"].dtype).itemsize
    tb = _choose_block_rows(bs_pad, n_pad, dim, hidden, w_bytes, out_bytes, block_rows)
    grid = (pl.cdiv(bs_pad, tb),)                 # ragged last block is masked by Pallas

    out = pl.pallas_call(
        functools.partial(time_encode_kernel, act_dtype=act_dtype),
        out_shape=jax.ShapeDtypeStruct((bs_pad, n_pad), out_dtype),
        grid_spec=pltpu.PrefetchScalarGridSpec(
            num_scalar_prefetch=0,
            grid=grid,
            in_specs=[
                pl.BlockSpec((tb, 1), lambda i: (i, 0)),            # t tile
                pl.BlockSpec((1, dim), lambda i: (0, 0)),           # freqs2
                pl.BlockSpec((1, dim), lambda i: (0, 0)),           # phase
                pl.BlockSpec((dim, hidden), lambda i: (0, 0)),      # w1
                pl.BlockSpec((1, hidden), lambda i: (0, 0)),        # b1
                pl.BlockSpec((hidden, n_pad), lambda i: (0, 0)),    # w2 (padded)
                pl.BlockSpec((1, n_pad), lambda i: (0, 0)),         # b2 (padded)
            ],
            out_specs=pl.BlockSpec((tb, n_pad), lambda i: (i, 0)),
        ),
        compiler_params=pltpu.CompilerParams(
            dimension_semantics=("parallel",),
            vmem_limit_bytes=32 * 1024 * 1024),
    )(t2d, prep["freqs2"], prep["phase"], prep["w1"], prep["b1"],
      prep["w2"], prep["b2"])

    if not trim_output:
        return out
    return out[:bs, :channel_time]


def init_params(key, channel_time):
    """Deterministic synthetic parameters (Linear weights stored as [in, out])."""
    dim = channel_time // 4
    hidden = channel_time // 2
    k1, k2, k3, k4 = jax.random.split(key, 4)
    scale1 = 1.0 / math.sqrt(dim)
    scale2 = 1.0 / math.sqrt(hidden)
    return {
        "w1": jax.random.uniform(k1, (dim, hidden), jnp.float32, -scale1, scale1),
        "b1": jax.random.uniform(k2, (hidden,), jnp.float32, -scale1, scale1),
        "w2": jax.random.uniform(k3, (hidden, channel_time), jnp.float32, -scale2, scale2),
        "b2": jax.random.uniform(k4, (channel_time,), jnp.float32, -scale2, scale2),
    }


def time_encode_ref(t, params, *, channel_time, theta=10000.0):
    """Pure-JAX reference mirroring the PyTorch module (explicit sin/cos concat)."""
    dim = channel_time // 4
    half_dim = dim // 2
    emb_scale = math.log(theta) / (half_dim - 1)
    freqs = jnp.exp(jnp.arange(half_dim, dtype=jnp.float32) * -emb_scale)
    arg = t[:, None].astype(jnp.float32) * freqs[None, :]
    emb = jnp.concatenate([jnp.sin(arg), jnp.cos(arg)], axis=-1)
    h = emb @ params["w1"] + params["b1"]
    h = _activate(h)
    return h @ params["w2"] + params["b2"]


if __name__ == "__main__":
    channel_time = 64          # -> sinusoidal dim 16, hidden 32, output 64 (padded to 128)
    bs = 8

    key = jax.random.PRNGKey(0)
    kp, kt = jax.random.split(key)
    params = init_params(kp, channel_time)
    # Time steps (e.g. diffusion steps) as floats.
    t = jax.random.randint(kt, (bs,), 0, 1000).astype(jnp.float32)

    ref = time_encode_ref(t, params, channel_time=channel_time)
    act_dtype = _default_act_dtype()

    # 1) All-f32 path: verifies that the fused phase-shifted sin, the lane
    #    padding and the grid tiling preserve the module semantics.  Tolerance
    #    is 5e-3 only because sin(x + pi/2) vs cos(x) differ at argument-
    #    reduction level for large arguments (t up to 1000).
    prep32 = prepare_params(params, channel_time, matmul_dtype=jnp.float32)
    out32 = jax.block_until_ready(
        time_encode(t, prep32, channel_time=channel_time,
                    out_dtype=jnp.float32, act_dtype=jnp.float32))
    assert out32.shape == (bs, channel_time) and out32.dtype == jnp.float32
    err32 = float(jnp.max(jnp.abs(out32 - ref)))
    assert jnp.allclose(out32, ref, atol=5e-3, rtol=5e-3), f"f32 mismatch, max|err|={err32}"

    # 2) Production path: bf16 MXU operands, f32 accumulation, bf16 output,
    #    device-appropriate activation dtype (bf16 on v6e/v7x, f32 on v5e).
    prep16 = prepare_params(params, channel_time, matmul_dtype=jnp.bfloat16)
    out16 = jax.block_until_ready(
        time_encode(t, prep16, channel_time=channel_time,
                    out_dtype=jnp.bfloat16, act_dtype=act_dtype))
    assert out16.shape == (bs, channel_time) and out16.dtype == jnp.bfloat16
    err16 = float(jnp.max(jnp.abs(out16.astype(jnp.float32) - ref)))
    assert jnp.allclose(out16.astype(jnp.float32), ref, atol=7e-2, rtol=7e-2), \
        f"bf16 mismatch, max|err|={err16}"

    # 3) Ragged multi-step grid: bs not a multiple of the tile, grid > 1 so the
    #    parallel batch axis exercises the masked last block (and v7x megacore).
    bs2 = 200
    t2 = jax.random.uniform(jax.random.PRNGKey(1), (bs2,), jnp.float32, 0.0, 1000.0)
    ref2 = time_encode_ref(t2, params, channel_time=channel_time)
    out2 = jax.block_until_ready(
        time_encode(t2, prep16, channel_time=channel_time, block_rows=64,
                    out_dtype=jnp.bfloat16, act_dtype=act_dtype))
    assert out2.shape == (bs2, channel_time) and out2.dtype == jnp.bfloat16
    err2 = float(jnp.max(jnp.abs(out2.astype(jnp.float32) - ref2)))
    assert jnp.allclose(out2.astype(jnp.float32), ref2, atol=7e-2, rtol=7e-2), \
        f"ragged-grid bf16 mismatch, max|err|={err2}"

    print("KERNEL_OK")
</pallas_src>

<mosaic_0001>
module attributes {stable_mosaic.version = 11 : i64} {
  func.func @time_encode_kernel(%arg0: i32, %arg1: memref<16x1xf32, #tpu.memory_space<vmem>>, %arg2: memref<1x16xf32, #tpu.memory_space<vmem>>, %arg3: memref<1x16xf32, #tpu.memory_space<vmem>>, %arg4: memref<16x32xf32, #tpu.memory_space<vmem>>, %arg5: memref<1x32xf32, #tpu.memory_space<vmem>>, %arg6: memref<32x128xf32, #tpu.memory_space<vmem>>, %arg7: memref<1x128xf32, #tpu.memory_space<vmem>>, %arg8: memref<16x128xf32, #tpu.memory_space<vmem>>) attributes {dimension_semantics = [#tpu.dimension_semantics<parallel>], iteration_bounds = array<i64: 1>, scalar_prefetch = 0 : i64, scratch_operands = 0 : i64, tpu.core_type = #tpu.core_type<tc>, window_params = [{transform_indices = @transform_0, window_bounds = array<i64: 16, 1>}, {pipeline_mode = #tpu.pipeline_mode<synchronous>, transform_indices = @transform_1, window_bounds = array<i64: 1, 16>}, {pipeline_mode = #tpu.pipeline_mode<synchronous>, transform_indices = @transform_2, window_bounds = array<i64: 1, 16>}, {pipeline_mode = #tpu.pipeline_mode<synchronous>, transform_indices = @transform_3, window_bounds = array<i64: 16, 32>}, {pipeline_mode = #tpu.pipeline_mode<synchronous>, transform_indices = @transform_4, window_bounds = array<i64: 1, 32>}, {pipeline_mode = #tpu.pipeline_mode<synchronous>, transform_indices = @transform_5, window_bounds = array<i64: 32, 128>}, {pipeline_mode = #tpu.pipeline_mode<synchronous>, transform_indices = @transform_6, window_bounds = array<i64: 1, 128>}, {transform_indices = @transform_7, window_bounds = array<i64: 16, 128>}]} {
    %c0 = arith.constant 0 : index
    %c0_0 = arith.constant 0 : index
    %0 = vector.load %arg1[%c0, %c0_0] : memref<16x1xf32, #tpu.memory_space<vmem>>, vector<16x1xf32>
    %c0_1 = arith.constant 0 : index
    %c0_2 = arith.constant 0 : index
    %1 = vector.load %arg2[%c0_1, %c0_2] : memref<1x16xf32, #tpu.memory_space<vmem>>, vector<1x16xf32>
    %2 = vector.broadcast %0 : vector<16x1xf32> to vector<16x16xf32>
    %3 = vector.broadcast %1 : vector<1x16xf32> to vector<16x16xf32>
    %4 = arith.mulf %2, %3 : vector<16x16xf32>
    %c0_3 = arith.constant 0 : index
    %c0_4 = arith.constant 0 : index
    %5 = vector.load %arg3[%c0_3, %c0_4] : memref<1x16xf32, #tpu.memory_space<vmem>>, vector<1x16xf32>
    %6 = vector.broadcast %5 : vector<1x16xf32> to vector<16x16xf32>
    %7 = arith.addf %4, %6 : vector<16x16xf32>
    %8 = math.sin %7 : vector<16x16xf32>
    %c0_5 = arith.constant 0 : index
    %c0_6 = arith.constant 0 : index
    %9 = vector.load %arg4[%c0_5, %c0_6] : memref<16x32xf32, #tpu.memory_space<vmem>>, vector<16x32xf32>
    %cst = arith.constant dense<0.000000e+00> : vector<16x32xf32>
    %10 = tpu.matmul %8, %9, %cst {dimension_numbers = #tpu.dot_dimension_numbers<[1], [0], [0], [1], [0, 0, 1, 1], [], []>} : vector<16x16xf32>, vector<16x32xf32>, vector<16x32xf32> -> vector<16x32xf32>
    %c0_7 = arith.constant 0 : index
    %c0_8 = arith.constant 0 : index
    %11 = vector.load %arg5[%c0_7, %c0_8] : memref<1x32xf32, #tpu.memory_space<vmem>>, vector<1x32xf32>
    %12 = vector.broadcast %11 : vector<1x32xf32> to vector<16x32xf32>
    %13 = arith.addf %10, %12 : vector<16x32xf32>
    %14 = arith.mulf %13, %13 : vector<16x32xf32>
    %15 = arith.mulf %13, %14 : vector<16x32xf32>
    %cst_9 = arith.constant 4.471500e-02 : f32
    %16 = vector.broadcast %cst_9 : f32 to vector<16x32xf32>
    %17 = arith.mulf %16, %15 : vector<16x32xf32>
    %18 = arith.addf %13, %17 : vector<16x32xf32>
    %cst_10 = arith.constant 0.797884583 : f32
    %19 = vector.broadcast %cst_10 : f32 to vector<16x32xf32>
    %20 = arith.mulf %19, %18 : vector<16x32xf32>
    %21 = math.tanh %20 : vector<16x32xf32>
    %cst_11 = arith.constant 1.000000e+00 : f32
    %22 = vector.broadcast %cst_11 : f32 to vector<16x32xf32>
    %23 = arith.addf %22, %21 : vector<16x32xf32>
    %cst_12 = arith.constant 5.000000e-01 : f32
    %24 = vector.broadcast %cst_12 : f32 to vector<16x32xf32>
    %25 = arith.mulf %24, %23 : vector<16x32xf32>
    %26 = arith.mulf %13, %25 : vector<16x32xf32>
    %c0_13 = arith.constant 0 : index
    %c0_14 = arith.constant 0 : index
    %27 = vector.load %arg6[%c0_13, %c0_14] : memref<32x128xf32, #tpu.memory_space<vmem>>, vector<32x128xf32>
    %cst_15 = arith.constant dense<0.000000e+00> : vector<16x128xf32>
    %28 = tpu.matmul %26, %27, %cst_15 {dimension_numbers = #tpu.dot_dimension_numbers<[1], [0], [0], [1], [0, 0, 1, 1], [], []>} : vector<16x32xf32>, vector<32x128xf32>, vector<16x128xf32> -> vector<16x128xf32>
    %c0_16 = arith.constant 0 : index
    %c0_17 = arith.constant 0 : index
    %29 = vector.load %arg7[%c0_16, %c0_17] : memref<1x128xf32, #tpu.memory_space<vmem>>, vector<1x128xf32>
    %30 = vector.broadcast %29 : vector<1x128xf32> to vector<16x128xf32>
    %31 = arith.addf %28, %30 : vector<16x128xf32>
    %c0_18 = arith.constant 0 : index
    %c0_19 = arith.constant 0 : index
    %32 = vector.load %arg8[%c0_18, %c0_19] : memref<16x128xf32, #tpu.memory_space<vmem>>, vector<16x128xf32>
    tpu.vector_store %arg8[%c0_18, %c0_19], %31 {strides = array<i32>} : memref<16x128xf32, #tpu.memory_space<vmem>>, vector<16x128xf32>,
    return
  }
  func.func @transform_0(%arg0: i32) -> (i32, i32) {
    %c0_i32 = arith.constant 0 : i32
    %c0_i32_0 = arith.constant 0 : i32
    return %arg0, %c0_i32 : i32, i32
  }
  func.func @transform_1(%arg0: i32) -> (i32, i32) {
    %c0_i32 = arith.constant 0 : i32
    %c0_i32_0 = arith.constant 0 : i32
    %c0_i32_1 = arith.constant 0 : i32
    return %c0_i32, %c0_i32_0 : i32, i32
  }
  func.func @transform_2(%arg0: i32) -> (i32, i32) {
    %c0_i32 = arith.constant 0 : i32
    %c0_i32_0 = arith.constant 0 : i32
    %c0_i32_1 = arith.constant 0 : i32
    return %c0_i32, %c0_i32_0 : i32, i32
  }
  func.func @transform_3(%arg0: i32) -> (i32, i32) {
    %c0_i32 = arith.constant 0 : i32
    %c0_i32_0 = arith.constant 0 : i32
    %c0_i32_1 = arith.constant 0 : i32
    return %c0_i32, %c0_i32_0 : i32, i32
  }
  func.func @transform_4(%arg0: i32) -> (i32, i32) {
    %c0_i32 = arith.constant 0 : i32
    %c0_i32_0 = arith.constant 0 : i32
    %c0_i32_1 = arith.constant 0 : i32
    return %c0_i32, %c0_i32_0 : i32, i32
  }
  func.func @transform_5(%arg0: i32) -> (i32, i32) {
    %c0_i32 = arith.constant 0 : i32
    %c0_i32_0 = arith.constant 0 : i32
    %c0_i32_1 = arith.constant 0 : i32
    return %c0_i32, %c0_i32_0 : i32, i32
  }
  func.func @transform_6(%arg0: i32) -> (i32, i32) {
    %c0_i32 = arith.constant 0 : i32
    %c0_i32_0 = arith.constant 0 : i32
    %c0_i32_1 = arith.constant 0 : i32
    return %c0_i32, %c0_i32_0 : i32, i32
  }
  func.func @transform_7(%arg0: i32) -> (i32, i32) {
    %c0_i32 = arith.constant 0 : i32
    %c0_i32_0 = arith.constant 0 : i32
    return %arg0, %c0_i32 : i32, i32
  }
}

</mosaic_0001>

<llo_original>
// kernel: time_encode.1
$region0: #{time_encode.1}
  #allocation0 [shape = 'u32[]', space=smem, size = 0x4, offset = 0x4, fixed_abs, tag = 'smem constant byte address 0x4 - core index']
  #allocation1 [shape = 'u32[144,128]{1,0:T(1,128)}', space=vmem, size = 0x12000, scoped, tag = 'internal scratch']
  %s0 = inlined_call_operand.vmem [shape: f32[16,1], index: 0, kind: input, shape index: {}]
  %s1 = inlined_call_operand.vmem [shape: f32[1,16], index: 1, kind: input, shape index: {}]
  %s2 = inlined_call_operand.vmem [shape: f32[1,16], index: 2, kind: input, shape index: {}]
  %s3 = inlined_call_operand.vmem [shape: f32[16,32], index: 3, kind: input, shape index: {}]
  %s4 = inlined_call_operand.vmem [shape: f32[1,32], index: 4, kind: input, shape index: {}]
  %s5 = inlined_call_operand.vmem [shape: f32[32,128], index: 5, kind: input, shape index: {}]
  %s6 = inlined_call_operand.vmem [shape: f32[1,128], index: 6, kind: input, shape index: {}]
  %s7 = inlined_call_operand.vmem [shape: f32[16,128], index: 7, kind: output, shape index: {}]
  %s8 = sld [smem:[#allocation0]]
  $region38: #{time_encode.1} parent=0
    _
  %s10 = ssub.s32 1, %s8
  %s11 = scalar_select 0, %s10, %s8
  // Predicated region
  $region2: #{time_encode.1} parent=0 // pred_check
    _
  $region3: #{time_encode.1} parent=0 // pred_check_branch
    %13 = sbr.rel (0) target = $region5
  $region4: #{time_encode.1} parent=0 // pred_region
    _
  $region5: #{time_encode.1} parent=0 // pred_fallthru
    _
  // Predicated region
  $region6: #{time_encode.1} parent=0 // pred_check
    _
  $region7: #{time_encode.1} parent=0 // pred_check_branch
    %15 = sbr.rel (0) target = $region9
  $region8: #{time_encode.1} parent=0 // pred_region
    _
  $region9: #{time_encode.1} parent=0 // pred_fallthru
    _
  // Predicated region
  $region10: #{time_encode.1} parent=0 // pred_check
    _
  $region11: #{time_encode.1} parent=0 // pred_check_branch
    %17 = sbr.rel (0) target = $region13
  $region12: #{time_encode.1} parent=0 // pred_region
    _
  $region13: #{time_encode.1} parent=0 // pred_fallthru
    _
  // Predicated region
  $region14: #{time_encode.1} parent=0 // pred_check
    _
  $region15: #{time_encode.1} parent=0 // pred_check_branch
    %19 = sbr.rel (0) target = $region17
  $region16: #{time_encode.1} parent=0 // pred_region
    _
  $region17: #{time_encode.1} parent=0 // pred_fallthru
    _
  // Predicated region
  $region18: #{time_encode.1} parent=0 // pred_check
    _
  $region19: #{time_encode.1} parent=0 // pred_check_branch
    %21 = sbr.rel (0) target = $region21
  $region20: #{time_encode.1} parent=0 // pred_region
    _
  $region21: #{time_encode.1} parent=0 // pred_fallthru
    _
  // Predicated region
  $region22: #{time_encode.1} parent=0 // pred_check
    _
  $region23: #{time_encode.1} parent=0 // pred_check_branch
    %23 = sbr.rel (0) target = $region25
  $region24: #{time_encode.1} parent=0 // pred_region
    _
  $region25: #{time_encode.1} parent=0 // pred_fallthru
    _
  // Predicated region
  $region26: #{time_encode.1} parent=0 // pred_check
    _
  $region27: #{time_encode.1} parent=0 // pred_check_branch
    %25 = sbr.rel (0) target = $region29
  $region28: #{time_encode.1} parent=0 // pred_region
    _
  $region29: #{time_encode.1} parent=0 // pred_fallthru
    _
  %v26 = vld [vmem:[%s0] sm:$0xff]
  %v27 = vld [vmem:[%s0 + $0x8] sm:$0xff]
  %v28 = vld [vmem:[%s1] sm:$0x1]
  %30 = vset.pattern.permute.xlu0 0
  %31 = vperm.xlu0 %30, %v26
  %v32 = vpop.permute.xlu0 %31
  %35 = vset.pattern.permute.xlu0 0
  %36 = vperm.xlu0 %35, %v27
  %v37 = vpop.permute.xlu0 %36
  %v40 = vlaneseq
  %v41 = vshrl.u32 %v40, 7
  %v42 = vsub.s32 0, %v41
  %v43 = vrot.slane %v28, %v42
  %v45 = vmul.f32 %v32, %v43
  %v46 = vmul.f32 %v37, %v43
  %v47 = vld [vmem:[%s2] sm:$0x1]
  %v49 = vlaneseq
  %v50 = vshrl.u32 %v49, 7
  %v51 = vsub.s32 0, %v50
  %v52 = vrot.slane %v47, %v51
  %v54 = vadd.f32 %v45, %v52
  %v55 = vadd.f32 %v46, %v52
  %v56 = vand.u32 2147483647, %v54
  %vm57 = vcmp.le.f32.partialorder %v56, 0.7853982
  %vm58 = vcmp.lt.s32.totalorder %v54, 0
  %v59 = vand.u32 %v54, 2139095040
  %v60 = vshrl.u32 %v59, 23
  %v61 = vsub.s32 %v60, 127
  %v62 = vand.u32 2147483647, %v54
  %v63 = vand.u32 %v62, 8388607
  %v64 = vor.u32 %v63, 8388608
  %v65 = vsub.s32 0, %v64
  %v66 = vadd.s32 %v61, 1
  %vm67 = vcmp.gt.s32.totalorder %v66, 0
  %v68 = vsel %vm67, %v66, 0
  %v69 = vshrl.u32 %v68, 5
  %v70 = vand.u32 %v68, 31
  %v71 = vsub.s32 32, %v70
  %v72 = vshrl.u32 683565275, %v71
  %v73 = vshll.u32 683565275, %v70
  %v74 = vshrl.u32 2475754826, %v71
  %v75 = vor.u32 %v73, %v74
  %v76 = vshll.u32 2475754826, %v70
  %v77 = vshrl.u32 2131351028, %v71
  %v78 = vor.u32 %v76, %v77
  %v79 = vshll.u32 2131351028, %v70
  %v80 = vshrl.u32 2102212464, %v71
  %v81 = vor.u32 %v79, %v80
  %v82 = vshll.u32 2102212464, %v70
  %v83 = vshrl.u32 920167782, %v71
  %v84 = vor.u32 %v82, %v83
  %v85 = vshll.u32 920167782, %v70
  %v86 = vshrl.u32 1326507024, %v71
  %v87 = vor.u32 %v85, %v86
  %vm88 = vcmp.lt.s32.totalorder %v69, 1
  %vm89 = vcmp.lt.s32.totalorder %v69, 2
  %vm90 = vcmp.lt.s32.totalorder %v69, 3
  %vm91 = vcmp.lt.s32.totalorder %v69, 4
  %v92 = vsel %vm88, %v72, %v75
  %v93 = vsel %vm91, %v81, 2102212464
  %v94 = vsel %vm90, %v78, %v93
  %v95 = vsel %vm89, %v92, %v94
  %v96 = vsel %vm88, %v75, %v78
  %v97 = vsel %vm91, %v84, 920167782
  %v98 = vsel %vm90, %v81, %v97
  %v99 = vsel %vm89, %v96, %v98
  %v100 = vsel %vm88, %v78, %v81
  %v101 = vsel %vm91, %v87, 1326507024
  %v102 = vsel %vm90, %v84, %v101
  %v103 = vsel %vm89, %v100, %v102
  %v104 = vshll.u32 %v64, 8
  %v105 = vmul.u32.u64.compose %v104, %v103
  %v106 = vextract.low.u32 %v105
  %v107 = vextract.high.u32 %v105
  %v108 = vmul.u32.u64.compose %v104, %v99
  %v109 = vextract.low.u32 %v108
  %v110 = vextract.high.u32 %v108
  %v111 = vmul.u32 %v104, %v95
  %v112 = vadd.s32 %v107, %v109
  %vm113 = vc.u32 %v107, %v109
  %v114 = vadd.s32 %v110, 1
  %v115 = vsel %vm113, %v114, %v110
  %v116 = vadd.s32 %v111, %v115
  %v117 = vadd.s32 %v116, 536870912
  %v118 = vshrl.u32 %v117, 30
  %v119 = vshll.u32 %v118, 30
  %v120 = vsub.s32 %v116, %v119
  %vm121 = vcmp.lt.s32.totalorder %v120, 0
  %v122 = vsub.s32 0, %v120
  %v123 = vsel %vm121, %v122, %v120
  %v124 = vclz %v123
  %v125 = vsub.s32 %v124, 2
  %vm126 = vcmp.gt.s32.totalorder 0, %v125
  %v127 = vsel %vm126, 0, %v125
  %v128 = vsub.s32 32, %v127
  %v129 = vshll.u32 %v120, %v127
  %v130 = vshrl.u32 %v112, %v128
  %v131 = vor.u32 %v129, %v130
  %v132 = vsub.s32 4294967266, %v127
  %v133 = vadd.s32 %v132, 127
  %v134 = vshll.u32 %v133, 23
  %v135 = vor.u32 4788187, %v134
  %v136 = vand.u32 2147483647, %v135
  %v138 = vcvt.s32.f32 %v131
  %v139 = vmul.f32 %v138, %v136
  %v140 = vxor.u32 %v139, 2147483648
  %v141 = vsel %vm58, %v140, %v139
  %v142 = vsub.s32 4, %v118
  %v143 = vsel %vm58, %v142, %v118
  %v144 = vsel %vm57, %v54, %v141
  %v145 = vsel %vm57, 0, %v143
  %v146 = vcosq.f32.pop %v144
  %v147 = vsinq.f32.pop %v144
  %vm148 = vweird.f32 %v54
  %v149 = vadd.s32 %v145, 3
  %v150 = vand.u32 %v149, 3
  %vm151 = vcmp.lt.s32.totalorder %v150, 2
  %vm152 = vcmp.eq.s32.totalorder %v150, 0
  %v153 = vxor.u32 %v147, 2147483648
  %v154 = vsel %vm152, %v146, %v153
  %vm155 = vcmp.eq.s32.totalorder %v150, 2
  %v156 = vxor.u32 %v146, 2147483648
  %v157 = vsel %vm155, %v156, %v147
  %v158 = vsel %vm151, %v154, %v157
  %v159 = vsel %vm148, nan, %v158
  %v160 = vand.u32 2147483647, %v55
  %vm161 = vcmp.le.f32.partialorder %v160, 0.7853982
  %vm162 = vcmp.lt.s32.totalorder %v55, 0
  %v163 = vand.u32 %v55, 2139095040
  %v164 = vshrl.u32 %v163, 23
  %v165 = vsub.s32 %v164, 127
  %v166 = vand.u32 2147483647, %v55
  %v167 = vand.u32 %v166, 8388607
  %v168 = vor.u32 %v167, 8388608
  %v169 = vsub.s32 0, %v168
  %v170 = vadd.s32 %v165, 1
  %vm171 = vcmp.gt.s32.totalorder %v170, 0
  %v172 = vsel %vm171, %v170, 0
  %v173 = vshrl.u32 %v172, 5
  %v174 = vand.u32 %v172, 31
  %v175 = vsub.s32 32, %v174
  %v176 = vshrl.u32 683565275, %v175
  %v177 = vshll.u32 683565275, %v174
  %v178 = vshrl.u32 2475754826, %v175
  %v179 = vor.u32 %v177, %v178
  %v180 = vshll.u32 2475754826, %v174
  %v181 = vshrl.u32 2131351028, %v175
  %v182 = vor.u32 %v180, %v181
  %v183 = vshll.u32 2131351028, %v174
  %v184 = vshrl.u32 2102212464, %v175
  %v185 = vor.u32 %v183, %v184
  %v186 = vshll.u32 2102212464, %v174
  %v187 = vshrl.u32 920167782, %v175
  %v188 = vor.u32 %v186, %v187
  %v189 = vshll.u32 920167782, %v174
  %v190 = vshrl.u32 1326507024, %v175
  %v191 = vor.u32 %v189, %v190
  %vm192 = vcmp.lt.s32.totalorder %v173, 1
  %vm193 = vcmp.lt.s32.totalorder %v173, 2
  %vm194 = vcmp.lt.s32.totalorder %v173, 3
  %vm195 = vcmp.lt.s32.totalorder %v173, 4
  %v196 = vsel %vm192, %v176, %v179
  %v197 = vsel %vm195, %v185, 2102212464
  %v198 = vsel %vm194, %v182, %v197
  %v199 = vsel %vm193, %v196, %v198
  %v200 = vsel %vm192, %v179, %v182
  %v201 = vsel %vm195, %v188, 920167782
  %v202 = vsel %vm194, %v185, %v201
  %v203 = vsel %vm193, %v200, %v202
  %v204 = vsel %vm192, %v182, %v185
  %v205 = vsel %vm195, %v191, 1326507024
  %v206 = vsel %vm194, %v188, %v205
  %v207 = vsel %vm193, %v204, %v206
  %v208 = vshll.u32 %v168, 8
  %v209 = vmul.u32.u64.compose %v208, %v207
  %v210 = vextract.low.u32 %v209
  %v211 = vextract.high.u32 %v209
  %v212 = vmul.u32.u64.compose %v208, %v203
  %v213 = vextract.low.u32 %v212
  %v214 = vextract.high.u32 %v212
  %v215 = vmul.u32 %v208, %v199
  %v216 = vadd.s32 %v211, %v213
  %vm217 = vc.u32 %v211, %v213
  %v218 = vadd.s32 %v214, 1
  %v219 = vsel %vm217, %v218, %v214
  %v220 = vadd.s32 %v215, %v219
  %v221 = vadd.s32 %v220, 536870912
  %v222 = vshrl.u32 %v221, 30
  %v223 = vshll.u32 %v222, 30
  %v224 = vsub.s32 %v220, %v223
  %vm225 = vcmp.lt.s32.totalorder %v224, 0
  %v226 = vsub.s32 0, %v224
  %v227 = vsel %vm225, %v226, %v224
  %v228 = vclz %v227
  %v229 = vsub.s32 %v228, 2
  %vm230 = vcmp.gt.s32.totalorder 0, %v229
  %v231 = vsel %vm230, 0, %v229
  %v232 = vsub.s32 32, %v231
  %v233 = vshll.u32 %v224, %v231
  %v234 = vshrl.u32 %v216, %v232
  %v235 = vor.u32 %v233, %v234
  %v236 = vsub.s32 4294967266, %v231
  %v237 = vadd.s32 %v236, 127
  %v238 = vshll.u32 %v237, 23
  %v239 = vor.u32 4788187, %v238
  %v240 = vand.u32 2147483647, %v239
  %v242 = vcvt.s32.f32 %v235
  %v243 = vmul.f32 %v242, %v240
  %v244 = vxor.u32 %v243, 2147483648
  %v245 = vsel %vm162, %v244, %v243
  %v246 = vsub.s32 4, %v222
  %v247 = vsel %vm162, %v246, %v222
  %v248 = vsel %vm161, %v55, %v245
  %v249 = vsel %vm161, 0, %v247
  %v250 = vcosq.f32.pop %v248
  %v251 = vsinq.f32.pop %v248
  %vm252 = vweird.f32 %v55
  %v253 = vadd.s32 %v249, 3
  %v254 = vand.u32 %v253, 3
  %vm255 = vcmp.lt.s32.totalorder %v254, 2
  %vm256 = vcmp.eq.s32.totalorder %v254, 0
  %v257 = vxor.u32 %v251, 2147483648
  %v258 = vsel %vm256, %v250, %v257
  %vm259 = vcmp.eq.s32.totalorder %v254, 2
  %v260 = vxor.u32 %v250, 2147483648
  %v261 = vsel %vm259, %v260, %v251
  %v262 = vsel %vm255, %v258, %v261
  %v263 = vsel %vm252, nan, %v262
  %v264 = vld [vmem:[%s3] sm:$0xff]
  %v265 = vld [vmem:[%s3 + $0x8] sm:$0xff]
  %v266 = vld [vmem:[%s4] sm:$0x1]
  %v268 = vlaneseq
  %v269 = vshrl.u32 %v268, 7
  %v270 = vsub.s32 0, %v269
  %v271 = vrot.slane %v266, %v270
  %vm273 = vcmask 130048
  %v275 = vsel %vm273, %v159, 0
  %v278 = vsel %vm273, %v263, 0
  %280 = vmatprep.subr.mxu0 0.0
  %281 = vmatpush1.msra.mxu0 %v264
  %282 = vmatprep.subr.mxu0 0.0
  %283 = vmatpush1.msra.mxu0 %v265
  %284 = vmatprep.subr.mxu0 0.0
  %285 = vmatpush1.msra.mxu0 0.0
  %286 = vmatprep.subr.mxu0 0.0
  %287 = vmatpush1.msra.mxu0 0.0
  %288 = vmatprep.subr.mxu0 0.0
  %289 = vmatpush1.msra.mxu0 0.0
  %290 = vmatprep.subr.mxu0 0.0
  %291 = vmatpush1.msra.mxu0 0.0
  %292 = vmatprep.subr.mxu0 0.0
  %293 = vmatpush1.msra.mxu0 0.0
  %294 = vmatprep.subr.mxu0 0.0
  %295 = vmatpush1.msra.mxu0 0.0
  %296 = vmatprep.subr.mxu0 0.0
  %297 = vmatpush1.msra.mxu0 0.0
  %298 = vmatprep.subr.mxu0 0.0
  %299 = vmatpush1.msra.mxu0 0.0
  %300 = vmatprep.subr.mxu0 0.0
  %301 = vmatpush1.msra.mxu0 0.0
  %302 = vmatprep.subr.mxu0 0.0
  %303 = vmatpush1.msra.mxu0 0.0
  %304 = vmatprep.subr.mxu0 0.0
  %305 = vmatpush1.msra.mxu0 0.0
  %306 = vmatprep.subr.mxu0 0.0
  %307 = vmatpush1.msra.mxu0 0.0
  %308 = vmatprep.subr.mxu0 0.0
  %309 = vmatpush1.msra.mxu0 0.0
  %310 = vmatprep.subr.mxu0 0.0
  %311 = vmatpush1.msra.mxu0 0.0
  %312 = vmatprep.subr.mxu0 0.0
  %313 = vmatpush1.msra.mxu0 0.0
  %314 = vmatprep.subr.mxu0 0.0
  %315 = vmatpush1.msra.mxu0 0.0
  %316 = vmatprep.subr.mxu0 0.0
  %317 = vmatpush1.msra.mxu0 0.0
  %318 = vmatprep.subr.mxu0 0.0
  %319 = vmatpush1.msra.mxu0 0.0
  %320 = vmatprep.subr.mxu0 0.0
  %321 = vmatpush1.msra.mxu0 0.0
  %322 = vmatprep.subr.mxu0 0.0
  %323 = vmatpush1.msra.mxu0 0.0
  %324 = vmatprep.subr.mxu0 0.0
  %325 = vmatpush1.msra.mxu0 0.0
  %326 = vmatprep.subr.mxu0 0.0
  %327 = vmatpush1.msra.mxu0 0.0
  %328 = vmatprep.subr.mxu0 0.0
  %329 = vmatpush1.msra.mxu0 0.0
  %330 = vmatprep.subr.mxu0 0.0
  %331 = vmatpush1.msra.mxu0 0.0
  %332 = vmatprep.subr.mxu0 0.0
  %333 = vmatpush1.msra.mxu0 0.0
  %334 = vmatprep.subr.mxu0 0.0
  %335 = vmatpush1.msra.mxu0 0.0
  %336 = vmatprep.subr.mxu0 0.0
  %337 = vmatpush1.msra.mxu0 0.0
  %338 = vmatprep.subr.mxu0 0.0
  %339 = vmatpush1.msra.mxu0 0.0
  %340 = vmatprep.subr.mxu0 0.0
  %341 = vmatpush1.msra.mxu0 0.0
  %342 = vmatprep.subr.mxu0 0.0
  %343 = vmatpush1.msra.mxu0 0.0
  %344 = vmatprep.mubr.f32.mxu0 0.0
  %345 = vmatmul.mubr.f32.gmra.mrb[0].mxu0 %v275
  %v346 = vpop.f32.mrb[0].mxu0
  %v347 = vadd.f32 %v271, %v346
  %v348 = vpop.f32.mrb[0].mxu0
  %349 = vmatprep.mubr.f32.mxu0 0.0
  %350 = vmatmul.mubr.f32.gmra.mrb[0].mxu0 %v278
  %v351 = vpop.f32.mrb[0].mxu0
  %v352 = vadd.f32 %v271, %v351
  %v353 = vpop.f32.mrb[0].mxu0
  %354 = vdwg.mxu0
  %v355 = vmul.f32 %v347, %v347
  %v356 = vmul.f32 %v352, %v352
  %v357 = vmul.f32 %v347, %v355
  %v358 = vmul.f32 %v352, %v356
  %v359 = vmul.f32 %v357, 0.044715
  %v360 = vmul.f32 %v358, 0.044715
  %v361 = vadd.f32 %v347, %v359
  %v362 = vadd.f32 %v352, %v360
  %v363 = vmul.f32 %v361, 0.7978846
  %v364 = vmul.f32 %v362, 0.7978846
  %v365 = vtanh.pop %v363
  %v366 = vtanh.pop %v364
  %v367 = vadd.f32 %v365, 1.0
  %v368 = vadd.f32 %v366, 1.0
  %v369 = vmul.f32 %v367, 0.5
  %v370 = vmul.f32 %v368, 0.5
  %v371 = vmul.f32 %v347, %v369
  %v372 = vmul.f32 %v352, %v370
  %v373 = vld [vmem:[%s5] sm:$0xff]
  %v374 = vld [vmem:[%s5 + $0x8] sm:$0xff]
  %v375 = vld [vmem:[%s5 + $0x10] sm:$0xff]
  %v376 = vld [vmem:[%s5 + $0x18] sm:$0xff]
  %v377 = vld [vmem:[%s6] sm:$0x1]
  %v379 = vlaneseq
  %v380 = vshrl.u32 %v379, 7
  %v381 = vsub.s32 0, %v380
  %v382 = vrot.slane %v377, %v381
  %vm384 = vcmask 261120
  %v386 = vsel %vm384, %v371, 0
  %v389 = vsel %vm384, %v372, 0
  %391 = vmatprep.subr.mxu0 0.0
  %392 = vmatpush1.msra.mxu0 %v373
  %393 = vmatprep.subr.mxu0 0.0
  %394 = vmatpush1.msra.mxu0 %v374
  %395 = vmatprep.subr.mxu0 0.0
  %396 = vmatpush1.msra.mxu0 %v375
  %397 = vmatprep.subr.mxu0 0.0
  %398 = vmatpush1.msra.mxu0 %v376
  %399 = vmatprep.subr.mxu0 0.0
  %400 = vmatpush1.msra.mxu0 0.0
  %401 = vmatprep.subr.mxu0 0.0
  %402 = vmatpush1.msra.mxu0 0.0
  %403 = vmatprep.subr.mxu0 0.0
  %404 = vmatpush1.msra.mxu0 0.0
  %405 = vmatprep.subr.mxu0 0.0
  %406 = vmatpush1.msra.mxu0 0.0
  %407 = vmatprep.subr.mxu0 0.0
  %408 = vmatpush1.msra.mxu0 0.0
  %409 = vmatprep.subr.mxu0 0.0
  %410 = vmatpush1.msra.mxu0 0.0
  %411 = vmatprep.subr.mxu0 0.0
  %412 = vmatpush1.msra.mxu0 0.0
  %413 = vmatprep.subr.mxu0 0.0
  %414 = vmatpush1.msra.mxu0 0.0
  %415 = vmatprep.subr.mxu0 0.0
  %416 = vmatpush1.msra.mxu0 0.0
  %417 = vmatprep.subr.mxu0 0.0
  %418 = vmatpush1.msra.mxu0 0.0
  %419 = vmatprep.subr.mxu0 0.0
  %420 = vmatpush1.msra.mxu0 0.0
  %421 = vmatprep.subr.mxu0 0.0
  %422 = vmatpush1.msra.mxu0 0.0
  %423 = vmatprep.subr.mxu0 0.0
  %424 = vmatpush1.msra.mxu0 0.0
  %425 = vmatprep.subr.mxu0 0.0
  %426 = vmatpush1.msra.mxu0 0.0
  %427 = vmatprep.subr.mxu0 0.0
  %428 = vmatpush1.msra.mxu0 0.0
  %429 = vmatprep.subr.mxu0 0.0
  %430 = vmatpush1.msra.mxu0 0.0
  %431 = vmatprep.subr.mxu0 0.0
  %432 = vmatpush1.msra.mxu0 0.0
  %433 = vmatprep.subr.mxu0 0.0
  %434 = vmatpush1.msra.mxu0 0.0
  %435 = vmatprep.subr.mxu0 0.0
  %436 = vmatpush1.msra.mxu0 0.0
  %437 = vmatprep.subr.mxu0 0.0
  %438 = vmatpush1.msra.mxu0 0.0
  %439 = vmatprep.subr.mxu0 0.0
  %440 = vmatpush1.msra.mxu0 0.0
  %441 = vmatprep.subr.mxu0 0.0
  %442 = vmatpush1.msra.mxu0 0.0
  %443 = vmatprep.subr.mxu0 0.0
  %444 = vmatpush1.msra.mxu0 0.0
  %445 = vmatprep.subr.mxu0 0.0
  %446 = vmatpush1.msra.mxu0 0.0
  %447 = vmatprep.subr.mxu0 0.0
  %448 = vmatpush1.msra.mxu0 0.0
  %449 = vmatprep.subr.mxu0 0.0
  %450 = vmatpush1.msra.mxu0 0.0
  %451 = vmatprep.subr.mxu0 0.0
  %452 = vmatpush1.msra.mxu0 0.0
  %453 = vmatprep.subr.mxu0 0.0
  %454 = vmatpush1.msra.mxu0 0.0
  %455 = vmatprep.mubr.f32.mxu0 0.0
  %456 = vmatmul.mubr.f32.gmra.mrb[0].mxu0 %v386
  %v457 = vpop.f32.mrb[0].mxu0
  %v458 = vadd.f32 %v382, %v457
  %v459 = vpop.f32.mrb[0].mxu0
  %460 = vmatprep.mubr.f32.mxu0 0.0
  %461 = vmatmul.mubr.f32.gmra.mrb[0].mxu0 %v389
  %v462 = vpop.f32.mrb[0].mxu0
  %v463 = vadd.f32 %v382, %v462
  %v464 = vpop.f32.mrb[0].mxu0
  %465 = vdwg.mxu0
  %466 = vst [vmem:[%s7] sm:$0xff] %v458
  %467 = vst [vmem:[%s7 + $0x8] sm:$0xff] %v463
  // Predicated region
  $region30: #{time_encode.1} parent=0 // pred_check
    _
  $region31: #{time_encode.1} parent=0 // pred_check_branch
    %469 = sbr.rel (0) target = $region33
  $region32: #{time_encode.1} parent=0 // pred_region
    _
  $region33: #{time_encode.1} parent=0 // pred_fallthru
    _
  // Predicated region
  $region34: #{time_encode.1} parent=0 // pred_check
    _
  $region35: #{time_encode.1} parent=0 // pred_check_branch
    %471 = sbr.rel (0) target = $region37
  $region36: #{time_encode.1} parent=0 // pred_region
    _
  $region37: #{time_encode.1} parent=0 // pred_fallthru
    _

</llo_original>
